<compile_context>
chip_gen: v5e
topology: v5e:2x2
jax: 0.10.0
libtpu: 0.0.40
codegen_flags: <defaults>
</compile_context>

<pallas_src>
import jax
import jax.numpy as jnp
from jax.experimental import pallas as pl
from jax.experimental.pallas import tpu as pltpu


def _make_kernel(cin, cout, cast_to_f32):
    def kernel(w_ref, b_ref, x_ref, o_ref):
        # w_ref: (Cout, Cin) f32 SMEM; b_ref: (Cout,) f32 SMEM
        # x_ref: (nb, Cin, st, 128) or (nb, Cin, ts) VMEM
        # o_ref: (nb, Cout, st, 128) or (nb, Cout, ts) VMEM
        def load(ci):
            xc = x_ref[:, ci]                       # one channel plane
            return xc.astype(jnp.float32) if cast_to_f32 else xc

        for co in range(cout):                      # fully unrolled VPU MACs
            acc = w_ref[co, 0] * load(0)            # SMEM scalar * plane
            for ci in range(1, cin):
                acc = acc + w_ref[co, ci] * load(ci)
            # direct per-channel store: lane-dense, no concat / XLU shuffles
            o_ref[:, co] = (acc + b_ref[co]).astype(o_ref.dtype)
    return kernel


def _largest_divisor_leq(n, cap):
    for d in range(min(n, max(1, cap)), 0, -1):
        if n % d == 0:
            return d
    return 1


def outconv_1x1(x_nchw, weight, bias, *, step_budget_bytes=12 << 20):
    """1x1 Conv2d forward.

    x_nchw: (N, Cin, H, W)
    weight: (Cout, Cin, 1, 1)   -- PyTorch Conv2d weight layout
    bias:   (Cout,)
    returns (N, Cout, H, W)
    """
    N, cin, H, W = x_nchw.shape
    cout = weight.shape[0]
    S = H * W

    in_it = jnp.dtype(x_nchw.dtype).itemsize
    out_dtype = x_nchw.dtype
    out_it = jnp.dtype(out_dtype).itemsize
    per_spatial_bytes = cin * in_it + cout * out_it   # HBM traffic per pixel

    # Pure views / tiny params -- no extra HBM pass over activations.
    w2 = weight.reshape(cout, cin).astype(jnp.float32)     # (Cout, Cin)
    b1 = bias.reshape(cout).astype(jnp.float32)            # (Cout,)
    cast = jnp.dtype(x_nchw.dtype) != jnp.dtype(jnp.float32)
    kernel = _make_kernel(cin, cout, cast)

    if S % 128 == 0:
        # --- Path A: spatial mapped onto (sublane, lane) = (S//128, 128) ---
        R = S // 128
        row_bytes = 128 * per_spatial_bytes
        max_rows = max(1, step_budget_bytes // row_bytes)
        if R <= max_rows:
            st = R                                           # full spatial
            nb = _largest_divisor_leq(N, max_rows // R)      # block batch too
        else:
            nb = 1
            st = max(8, (max_rows // 8) * 8)                 # sublane-dense
            # prefer an exact divisor of R near the cap (no padded tail block)
            for t in range(st, max(8, st // 2) - 1, -8):
                if R % t == 0:
                    st = t
                    break
        grid = (N // nb, pl.cdiv(R, st))
        x_view = x_nchw.reshape(N, cin, R, 128)
        x_spec = pl.BlockSpec((nb, cin, st, 128), lambda n, j: (n, 0, j, 0))
        o_spec = pl.BlockSpec((nb, cout, st, 128), lambda n, j: (n, 0, j, 0))
        out_view_shape = (N, cout, R, 128)
        step_bytes = nb * st * 128 * per_spatial_bytes
    else:
        # --- Path B: S not a multiple of 128; keep spatial flat on lanes ---
        max_elems = max(1, step_budget_bytes // per_spatial_bytes)
        if S <= max_elems:
            ts = S                                           # full spatial
            nb = _largest_divisor_leq(N, max_elems // S)
        else:
            nb = 1
            ts = max(128, (max_elems // 128) * 128)          # lane-dense tile
        grid = (N // nb, pl.cdiv(S, ts))
        x_view = x_nchw.reshape(N, cin, S)
        x_spec = pl.BlockSpec((nb, cin, ts), lambda n, j: (n, 0, j))
        o_spec = pl.BlockSpec((nb, cout, ts), lambda n, j: (n, 0, j))
        out_view_shape = (N, cout, S)
        step_bytes = nb * ts * per_spatial_bytes

    # Explicit scoped-VMEM budget: covers double-buffered in+out with headroom,
    # but stays well under v7x's 64 MiB physical VMEM (and raises v5e's 16 MiB
    # scoped default).
    vmem_limit = int(min(48 << 20, max(32 << 20, 4 * step_bytes)))

    cost = pl.CostEstimate(
        flops=2 * N * S * cin * cout,
        transcendentals=0,
        bytes_accessed=N * S * per_spatial_bytes + (cout * cin + cout) * 4,
    )

    out = pl.pallas_call(
        kernel,
        out_shape=jax.ShapeDtypeStruct(out_view_shape, out_dtype),
        grid_spec=pltpu.PrefetchScalarGridSpec(
            num_scalar_prefetch=0,
            grid=grid,
            in_specs=[
                pl.BlockSpec(memory_space=pltpu.MemorySpace.SMEM),   # weight
                pl.BlockSpec(memory_space=pltpu.MemorySpace.SMEM),   # bias
                x_spec,                                              # x tile
            ],
            out_specs=o_spec,
        ),
        compiler_params=pltpu.CompilerParams(
            dimension_semantics=("parallel", "parallel"),
            vmem_limit_bytes=vmem_limit,
        ),
        cost_estimate=cost,
    )(w2, b1, x_view)

    return out.reshape(N, cout, H, W)


if __name__ == "__main__":
    # Deterministic synthetic parameters / input (module: OutConv(4, 3)).
    in_channels, out_channels = 4, 3
    N, H, W = 2, 16, 16

    key = jax.random.PRNGKey(0)
    k_x, k_w, k_b = jax.random.split(key, 3)

    x = jax.random.normal(k_x, (N, in_channels, H, W), dtype=jnp.float32)
    # nn.Conv2d(in, out, kernel_size=1) parameter shapes:
    weight = jax.random.normal(
        k_w, (out_channels, in_channels, 1, 1), dtype=jnp.float32) * 0.1
    bias = jax.random.normal(k_b, (out_channels,), dtype=jnp.float32) * 0.1

    y = outconv_1x1(x, weight, bias)
    y = jax.block_until_ready(y)

    # Sanity check against a plain-JAX reference of the 1x1 conv.
    ref = jnp.einsum("nchw,oc->nohw", x, weight.reshape(out_channels, in_channels))
    ref = ref + bias.reshape(1, out_channels, 1, 1)
    assert y.shape == (N, out_channels, H, W)
    assert jnp.allclose(y, ref, atol=1e-5, rtol=1e-5)

    print("KERNEL_OK")
</pallas_src>

<mosaic_0001>
module attributes {stable_mosaic.version = 11 : i64} {
  func.func @kernel(%arg0: i32, %arg1: i32, %arg2: memref<3x4xf32, #tpu.memory_space<smem>>, %arg3: memref<3xf32, #tpu.memory_space<smem>>, %arg4: memref<2x4x2x128xf32, #tpu.memory_space<vmem>>, %arg5: memref<2x3x2x128xf32, #tpu.memory_space<vmem>>) attributes {dimension_semantics = [#tpu.dimension_semantics<parallel>, #tpu.dimension_semantics<parallel>], iteration_bounds = array<i64: 1, 1>, scalar_prefetch = 0 : i64, scratch_operands = 0 : i64, tpu.core_type = #tpu.core_type<tc>, window_params = [{transform_indices = @transform_0, window_bounds = array<i64: 3, 4>}, {transform_indices = @transform_1, window_bounds = array<i64: 3>}, {transform_indices = @transform_2, window_bounds = array<i64: 2, 4, 2, 128>}, {transform_indices = @transform_3, window_bounds = array<i64: 2, 3, 2, 128>}]} {
    %c0 = arith.constant 0 : index
    %c0_0 = arith.constant 0 : index
    %0 = memref.load %arg2[%c0, %c0_0] : memref<3x4xf32, #tpu.memory_space<smem>>
    %c0_1 = arith.constant 0 : index
    %c0_2 = arith.constant 0 : index
    %c0_3 = arith.constant 0 : index
    %c0_4 = arith.constant 0 : index
    %1 = vector.load %arg4[%c0_1, %c0_2, %c0_3, %c0_4] : memref<2x4x2x128xf32, #tpu.memory_space<vmem>>, vector<2x1x2x128xf32>
    %2 = vector.shape_cast %1 : vector<2x1x2x128xf32> to vector<2x2x128xf32>
    %3 = vector.broadcast %0 : f32 to vector<2x2x128xf32>
    %4 = arith.mulf %3, %2 : vector<2x2x128xf32>
    %c0_5 = arith.constant 0 : index
    %c1 = arith.constant 1 : index
    %5 = memref.load %arg2[%c0_5, %c1] : memref<3x4xf32, #tpu.memory_space<smem>>
    %c0_6 = arith.constant 0 : index
    %c1_7 = arith.constant 1 : index
    %c0_8 = arith.constant 0 : index
    %c0_9 = arith.constant 0 : index
    %6 = vector.load %arg4[%c0_6, %c1_7, %c0_8, %c0_9] : memref<2x4x2x128xf32, #tpu.memory_space<vmem>>, vector<2x1x2x128xf32>
    %7 = vector.shape_cast %6 : vector<2x1x2x128xf32> to vector<2x2x128xf32>
    %8 = vector.broadcast %5 : f32 to vector<2x2x128xf32>
    %9 = arith.mulf %8, %7 : vector<2x2x128xf32>
    %10 = arith.addf %4, %9 : vector<2x2x128xf32>
    %c0_10 = arith.constant 0 : index
    %c2 = arith.constant 2 : index
    %11 = memref.load %arg2[%c0_10, %c2] : memref<3x4xf32, #tpu.memory_space<smem>>
    %c0_11 = arith.constant 0 : index
    %c2_12 = arith.constant 2 : index
    %c0_13 = arith.constant 0 : index
    %c0_14 = arith.constant 0 : index
    %12 = vector.load %arg4[%c0_11, %c2_12, %c0_13, %c0_14] : memref<2x4x2x128xf32, #tpu.memory_space<vmem>>, vector<2x1x2x128xf32>
    %13 = vector.shape_cast %12 : vector<2x1x2x128xf32> to vector<2x2x128xf32>
    %14 = vector.broadcast %11 : f32 to vector<2x2x128xf32>
    %15 = arith.mulf %14, %13 : vector<2x2x128xf32>
    %16 = arith.addf %10, %15 : vector<2x2x128xf32>
    %c0_15 = arith.constant 0 : index
    %c3 = arith.constant 3 : index
    %17 = memref.load %arg2[%c0_15, %c3] : memref<3x4xf32, #tpu.memory_space<smem>>
    %c0_16 = arith.constant 0 : index
    %c3_17 = arith.constant 3 : index
    %c0_18 = arith.constant 0 : index
    %c0_19 = arith.constant 0 : index
    %18 = vector.load %arg4[%c0_16, %c3_17, %c0_18, %c0_19] : memref<2x4x2x128xf32, #tpu.memory_space<vmem>>, vector<2x1x2x128xf32>
    %19 = vector.shape_cast %18 : vector<2x1x2x128xf32> to vector<2x2x128xf32>
    %20 = vector.broadcast %17 : f32 to vector<2x2x128xf32>
    %21 = arith.mulf %20, %19 : vector<2x2x128xf32>
    %22 = arith.addf %16, %21 : vector<2x2x128xf32>
    %c0_20 = arith.constant 0 : index
    %23 = memref.load %arg3[%c0_20] : memref<3xf32, #tpu.memory_space<smem>>
    %24 = vector.broadcast %23 : f32 to vector<2x2x128xf32>
    %25 = arith.addf %22, %24 : vector<2x2x128xf32>
    %c0_21 = arith.constant 0 : index
    %c0_22 = arith.constant 0 : index
    %c0_23 = arith.constant 0 : index
    %c0_24 = arith.constant 0 : index
    %26 = vector.load %arg5[%c0_21, %c0_22, %c0_23, %c0_24] : memref<2x3x2x128xf32, #tpu.memory_space<vmem>>, vector<2x1x2x128xf32>
    %27 = vector.shape_cast %26 : vector<2x1x2x128xf32> to vector<2x2x128xf32>
    %28 = vector.shape_cast %25 : vector<2x2x128xf32> to vector<2x1x2x128xf32>
    tpu.vector_store %arg5[%c0_21, %c0_22, %c0_23, %c0_24], %28 {strides = array<i32>} : memref<2x3x2x128xf32, #tpu.memory_space<vmem>>, vector<2x1x2x128xf32>,
    %c1_25 = arith.constant 1 : index
    %c0_26 = arith.constant 0 : index
    %29 = memref.load %arg2[%c1_25, %c0_26] : memref<3x4xf32, #tpu.memory_space<smem>>
    %c0_27 = arith.constant 0 : index
    %c0_28 = arith.constant 0 : index
    %c0_29 = arith.constant 0 : index
    %c0_30 = arith.constant 0 : index
    %30 = vector.load %arg4[%c0_27, %c0_28, %c0_29, %c0_30] : memref<2x4x2x128xf32, #tpu.memory_space<vmem>>, vector<2x1x2x128xf32>
    %31 = vector.shape_cast %30 : vector<2x1x2x128xf32> to vector<2x2x128xf32>
    %32 = vector.broadcast %29 : f32 to vector<2x2x128xf32>
    %33 = arith.mulf %32, %31 : vector<2x2x128xf32>
    %c1_31 = arith.constant 1 : index
    %c1_32 = arith.constant 1 : index
    %34 = memref.load %arg2[%c1_31, %c1_32] : memref<3x4xf32, #tpu.memory_space<smem>>
    %c0_33 = arith.constant 0 : index
    %c1_34 = arith.constant 1 : index
    %c0_35 = arith.constant 0 : index
    %c0_36 = arith.constant 0 : index
    %35 = vector.load %arg4[%c0_33, %c1_34, %c0_35, %c0_36] : memref<2x4x2x128xf32, #tpu.memory_space<vmem>>, vector<2x1x2x128xf32>
    %36 = vector.shape_cast %35 : vector<2x1x2x128xf32> to vector<2x2x128xf32>
    %37 = vector.broadcast %34 : f32 to vector<2x2x128xf32>
    %38 = arith.mulf %37, %36 : vector<2x2x128xf32>
    %39 = arith.addf %33, %38 : vector<2x2x128xf32>
    %c1_37 = arith.constant 1 : index
    %c2_38 = arith.constant 2 : index
    %40 = memref.load %arg2[%c1_37, %c2_38] : memref<3x4xf32, #tpu.memory_space<smem>>
    %c0_39 = arith.constant 0 : index
    %c2_40 = arith.constant 2 : index
    %c0_41 = arith.constant 0 : index
    %c0_42 = arith.constant 0 : index
    %41 = vector.load %arg4[%c0_39, %c2_40, %c0_41, %c0_42] : memref<2x4x2x128xf32, #tpu.memory_space<vmem>>, vector<2x1x2x128xf32>
    %42 = vector.shape_cast %41 : vector<2x1x2x128xf32> to vector<2x2x128xf32>
    %43 = vector.broadcast %40 : f32 to vector<2x2x128xf32>
    %44 = arith.mulf %43, %42 : vector<2x2x128xf32>
    %45 = arith.addf %39, %44 : vector<2x2x128xf32>
    %c1_43 = arith.constant 1 : index
    %c3_44 = arith.constant 3 : index
    %46 = memref.load %arg2[%c1_43, %c3_44] : memref<3x4xf32, #tpu.memory_space<smem>>
    %c0_45 = arith.constant 0 : index
    %c3_46 = arith.constant 3 : index
    %c0_47 = arith.constant 0 : index
    %c0_48 = arith.constant 0 : index
    %47 = vector.load %arg4[%c0_45, %c3_46, %c0_47, %c0_48] : memref<2x4x2x128xf32, #tpu.memory_space<vmem>>, vector<2x1x2x128xf32>
    %48 = vector.shape_cast %47 : vector<2x1x2x128xf32> to vector<2x2x128xf32>
    %49 = vector.broadcast %46 : f32 to vector<2x2x128xf32>
    %50 = arith.mulf %49, %48 : vector<2x2x128xf32>
    %51 = arith.addf %45, %50 : vector<2x2x128xf32>
    %c1_49 = arith.constant 1 : index
    %52 = memref.load %arg3[%c1_49] : memref<3xf32, #tpu.memory_space<smem>>
    %53 = vector.broadcast %52 : f32 to vector<2x2x128xf32>
    %54 = arith.addf %51, %53 : vector<2x2x128xf32>
    %c0_50 = arith.constant 0 : index
    %c1_51 = arith.constant 1 : index
    %c0_52 = arith.constant 0 : index
    %c0_53 = arith.constant 0 : index
    %55 = vector.load %arg5[%c0_50, %c1_51, %c0_52, %c0_53] : memref<2x3x2x128xf32, #tpu.memory_space<vmem>>, vector<2x1x2x128xf32>
    %56 = vector.shape_cast %55 : vector<2x1x2x128xf32> to vector<2x2x128xf32>
    %57 = vector.shape_cast %54 : vector<2x2x128xf32> to vector<2x1x2x128xf32>
    tpu.vector_store %arg5[%c0_50, %c1_51, %c0_52, %c0_53], %57 {strides = array<i32>} : memref<2x3x2x128xf32, #tpu.memory_space<vmem>>, vector<2x1x2x128xf32>,
    %c2_54 = arith.constant 2 : index
    %c0_55 = arith.constant 0 : index
    %58 = memref.load %arg2[%c2_54, %c0_55] : memref<3x4xf32, #tpu.memory_space<smem>>
    %c0_56 = arith.constant 0 : index
    %c0_57 = arith.constant 0 : index
    %c0_58 = arith.constant 0 : index
    %c0_59 = arith.constant 0 : index
    %59 = vector.load %arg4[%c0_56, %c0_57, %c0_58, %c0_59] : memref<2x4x2x128xf32, #tpu.memory_space<vmem>>, vector<2x1x2x128xf32>
    %60 = vector.shape_cast %59 : vector<2x1x2x128xf32> to vector<2x2x128xf32>
    %61 = vector.broadcast %58 : f32 to vector<2x2x128xf32>
    %62 = arith.mulf %61, %60 : vector<2x2x128xf32>
    %c2_60 = arith.constant 2 : index
    %c1_61 = arith.constant 1 : index
    %63 = memref.load %arg2[%c2_60, %c1_61] : memref<3x4xf32, #tpu.memory_space<smem>>
    %c0_62 = arith.constant 0 : index
    %c1_63 = arith.constant 1 : index
    %c0_64 = arith.constant 0 : index
    %c0_65 = arith.constant 0 : index
    %64 = vector.load %arg4[%c0_62, %c1_63, %c0_64, %c0_65] : memref<2x4x2x128xf32, #tpu.memory_space<vmem>>, vector<2x1x2x128xf32>
    %65 = vector.shape_cast %64 : vector<2x1x2x128xf32> to vector<2x2x128xf32>
    %66 = vector.broadcast %63 : f32 to vector<2x2x128xf32>
    %67 = arith.mulf %66, %65 : vector<2x2x128xf32>
    %68 = arith.addf %62, %67 : vector<2x2x128xf32>
    %c2_66 = arith.constant 2 : index
    %c2_67 = arith.constant 2 : index
    %69 = memref.load %arg2[%c2_66, %c2_67] : memref<3x4xf32, #tpu.memory_space<smem>>
    %c0_68 = arith.constant 0 : index
    %c2_69 = arith.constant 2 : index
    %c0_70 = arith.constant 0 : index
    %c0_71 = arith.constant 0 : index
    %70 = vector.load %arg4[%c0_68, %c2_69, %c0_70, %c0_71] : memref<2x4x2x128xf32, #tpu.memory_space<vmem>>, vector<2x1x2x128xf32>
    %71 = vector.shape_cast %70 : vector<2x1x2x128xf32> to vector<2x2x128xf32>
    %72 = vector.broadcast %69 : f32 to vector<2x2x128xf32>
    %73 = arith.mulf %72, %71 : vector<2x2x128xf32>
    %74 = arith.addf %68, %73 : vector<2x2x128xf32>
    %c2_72 = arith.constant 2 : index
    %c3_73 = arith.constant 3 : index
    %75 = memref.load %arg2[%c2_72, %c3_73] : memref<3x4xf32, #tpu.memory_space<smem>>
    %c0_74 = arith.constant 0 : index
    %c3_75 = arith.constant 3 : index
    %c0_76 = arith.constant 0 : index
    %c0_77 = arith.constant 0 : index
    %76 = vector.load %arg4[%c0_74, %c3_75, %c0_76, %c0_77] : memref<2x4x2x128xf32, #tpu.memory_space<vmem>>, vector<2x1x2x128xf32>
    %77 = vector.shape_cast %76 : vector<2x1x2x128xf32> to vector<2x2x128xf32>
    %78 = vector.broadcast %75 : f32 to vector<2x2x128xf32>
    %79 = arith.mulf %78, %77 : vector<2x2x128xf32>
    %80 = arith.addf %74, %79 : vector<2x2x128xf32>
    %c2_78 = arith.constant 2 : index
    %81 = memref.load %arg3[%c2_78] : memref<3xf32, #tpu.memory_space<smem>>
    %82 = vector.broadcast %81 : f32 to vector<2x2x128xf32>
    %83 = arith.addf %80, %82 : vector<2x2x128xf32>
    %c0_79 = arith.constant 0 : index
    %c2_80 = arith.constant 2 : index
    %c0_81 = arith.constant 0 : index
    %c0_82 = arith.constant 0 : index
    %84 = vector.load %arg5[%c0_79, %c2_80, %c0_81, %c0_82] : memref<2x3x2x128xf32, #tpu.memory_space<vmem>>, vector<2x1x2x128xf32>
    %85 = vector.shape_cast %84 : vector<2x1x2x128xf32> to vector<2x2x128xf32>
    %86 = vector.shape_cast %83 : vector<2x2x128xf32> to vector<2x1x2x128xf32>
    tpu.vector_store %arg5[%c0_79, %c2_80, %c0_81, %c0_82], %86 {strides = array<i32>} : memref<2x3x2x128xf32, #tpu.memory_space<vmem>>, vector<2x1x2x128xf32>,
    return
  }
  func.func @transform_0(%arg0: i32, %arg1: i32) -> (i32, i32) {
    %c0_i32 = arith.constant 0 : i32
    %c0_i32_0 = arith.constant 0 : i32
    %c0_i32_1 = arith.constant 0 : i32
    return %c0_i32, %c0_i32_0 : i32, i32
  }
  func.func @transform_1(%arg0: i32, %arg1: i32) -> i32 {
    %c0_i32 = arith.constant 0 : i32
    %c0_i32_0 = arith.constant 0 : i32
    return %c0_i32 : i32
  }
  func.func @transform_2(%arg0: i32, %arg1: i32) -> (i32, i32, i32, i32) {
    %c0_i32 = arith.constant 0 : i32
    %c0_i32_0 = arith.constant 0 : i32
    %c0_i32_1 = arith.constant 0 : i32
    return %arg0, %c0_i32, %arg1, %c0_i32_0 : i32, i32, i32, i32
  }
  func.func @transform_3(%arg0: i32, %arg1: i32) -> (i32, i32, i32, i32) {
    %c0_i32 = arith.constant 0 : i32
    %c0_i32_0 = arith.constant 0 : i32
    %c0_i32_1 = arith.constant 0 : i32
    return %arg0, %c0_i32, %arg1, %c0_i32_0 : i32, i32, i32, i32
  }
}

</mosaic_0001>

<llo_original>
// kernel: tpu_custom_call.1
$region0: #{tpu_custom_call.1}
  #allocation0 [shape = 'u32[]', space=smem, size = 0x4, offset = 0x4, fixed_abs, tag = 'smem constant byte address 0x4 - core index']
  #allocation1 [shape = 'u32[72,128]{1,0:T(1,128)}', space=vmem, size = 0x9000, scoped, tag = 'internal scratch']
  %s0 = inlined_call_operand.hbm [shape: f32[3,4], index: 0, kind: input, shape index: {}]
  %s1 = inlined_call_operand.hbm [shape: f32[3], index: 1, kind: input, shape index: {}]
  %s2 = inlined_call_operand.hbm [shape: f32[2,4,2,128], index: 2, kind: input, shape index: {}]
  %s3 = inlined_call_operand.hbm [shape: f32[2,3,2,128], index: 3, kind: output, shape index: {}]
  %s4 = sld [smem:[#allocation0]]
  $region34: #{tpu_custom_call.1} parent=0
    _
  %s6 = ssub.s32 1, %s4
  %s7 = scalar_select 0, %s6, %s4
  $region1: #{tpu_custom_call.1} parent=0
    #allocation2 [shape = 'u8[2048]{0}', space=smem, size = 0x800, scoped, tag = 'input window, operand 0, single buffered']
    #allocation3 [shape = 's32[1]{0}', space=sflag, size = 0x4, scoped, tag = 'scoped memory for tpu_custom_call.1']
    #allocation4 [shape = 's32[1]{0}', space=sflag, size = 0x4, scoped, tag = 'scoped memory for tpu_custom_call.1']
    #allocation5 [shape = 's32[1]{0}', space=sflag, size = 0x4, scoped, tag = 'scoped memory for tpu_custom_call.1']
    #allocation6 [shape = 'u8[512]{0}', space=smem, size = 0x200, scoped, tag = 'input window, operand 1, single buffered']
    #allocation7 [shape = 's32[1]{0}', space=sflag, size = 0x4, scoped, tag = 'scoped memory for tpu_custom_call.1']
    #allocation8 [shape = 'u8[8192]{0}', space=vmem, size = 0x2000, scoped, tag = 'input window, operand 2, single buffered']
    #allocation9 [shape = 'u8[6144]{0}', space=vmem, size = 0x1800, scoped, tag = 'output window, operand 0, single buffered']
    %8 = vsyncpa [#allocation5], 0
    %9 = vsyncpa [#allocation7], 0
    %10 = vsyncpa [#allocation3], 0
    %11 = vsyncpa [#allocation4], 0
    // Predicated region
    $region2: #{tpu_custom_call.1} parent=1 // pred_check
      _
    $region3: #{tpu_custom_call.1} parent=1 // pred_check_branch
      %13 = sbr.rel (0) target = $region5
    $region4: #{tpu_custom_call.1} parent=1 // pred_region
      %15 = vsyncadd [#allocation5], 0
      %s17 = sshll.u32 %s0, 4
      %s18 = int_to_ptr.hbm [resolvable:$true] %s17
      %20 = dma.hbm_to_smem %s18, 64, [#allocation2], [#allocation5]
    $region5: #{tpu_custom_call.1} parent=1 // pred_fallthru
      _
    // Predicated region
    $region6: #{tpu_custom_call.1} parent=1 // pred_check
      _
    $region7: #{tpu_custom_call.1} parent=1 // pred_check_branch
      %22 = sbr.rel (0) target = $region9
    $region8: #{tpu_custom_call.1} parent=1 // pred_region
      %24 = vsyncadd [#allocation7], 0
      %s26 = sshll.u32 %s1, 4
      %s27 = int_to_ptr.hbm [resolvable:$true] %s26
      %29 = dma.hbm_to_smem %s27, 16, [#allocation6], [#allocation7]
    $region9: #{tpu_custom_call.1} parent=1 // pred_fallthru
      _
    // Predicated region
    $region10: #{tpu_custom_call.1} parent=1 // pred_check
      _
    $region11: #{tpu_custom_call.1} parent=1 // pred_check_branch
      %31 = sbr.rel (0) target = $region13
    $region12: #{tpu_custom_call.1} parent=1 // pred_region
      %33 = vsyncadd [#allocation3], 0
      %s34 = sshll.u32 %s2, 4
      %s35 = int_to_ptr.hbm [resolvable:$true] %s34
      %s36 = sshll.u32 [#allocation8], 4
      %s37 = int_to_ptr.vmem [resolvable:$true] %s36
      %42 = dma.hbm_to_vmem [thread:$0]  %s35, 256, %s37, [#allocation3], 32, 32, 2
    $region13: #{tpu_custom_call.1} parent=1 // pred_fallthru
      _
    // Predicated region
    $region14: #{tpu_custom_call.1} parent=1 // pred_check
      _
    $region15: #{tpu_custom_call.1} parent=1 // pred_check_branch
      %44 = sbr.rel (0) target = $region17
    $region16: #{tpu_custom_call.1} parent=1 // pred_region
      %46 = dma.done [#allocation5], 64
    $region17: #{tpu_custom_call.1} parent=1 // pred_fallthru
      _
    // Predicated region
    $region18: #{tpu_custom_call.1} parent=1 // pred_check
      _
    $region19: #{tpu_custom_call.1} parent=1 // pred_check_branch
      %48 = sbr.rel (0) target = $region21
    $region20: #{tpu_custom_call.1} parent=1 // pred_region
      %50 = dma.done [#allocation7], 16
    $region21: #{tpu_custom_call.1} parent=1 // pred_fallthru
      _
    // Predicated region
    $region22: #{tpu_custom_call.1} parent=1 // pred_check
      _
    $region23: #{tpu_custom_call.1} parent=1 // pred_check_branch
      %52 = sbr.rel (0) target = $region25
    $region24: #{tpu_custom_call.1} parent=1 // pred_region
      %54 = dma.done [#allocation3], 256
    $region25: #{tpu_custom_call.1} parent=1 // pred_fallthru
      _
    %55 = sfence
    %s56 = sld [smem:[#allocation2]]
    %v57 = vld [vmem:[#allocation8] sm:$0x3]
    %v58 = vld [vmem:[#allocation8 + $0x8] sm:$0x3]
    %v59 = vstv %s56
    %v60 = vmul.f32 %v59, %v57
    %v61 = vmul.f32 %v59, %v58
    %s62 = sld [smem:[#allocation2 + $0x1]]
    %s63 = scalar_lea.vmem [#allocation8], 2
    %v64 = vld [vmem:[%s63] sm:$0x3]
    %v65 = vld [vmem:[%s63 + $0x8] sm:$0x3]
    %v66 = vstv %s62
    %v67 = vmul.f32 %v66, %v64
    %v68 = vmul.f32 %v66, %v65
    %v69 = vadd.f32 %v60, %v67
    %v70 = vadd.f32 %v61, %v68
    %s71 = sld [smem:[#allocation2 + $0x2]]
    %s72 = scalar_lea.vmem [#allocation8], 4
    %v73 = vld [vmem:[%s72] sm:$0x3]
    %v74 = vld [vmem:[%s72 + $0x8] sm:$0x3]
    %v75 = vstv %s71
    %v76 = vmul.f32 %v75, %v73
    %v77 = vmul.f32 %v75, %v74
    %v78 = vadd.f32 %v69, %v76
    %v79 = vadd.f32 %v70, %v77
    %s80 = sld [smem:[#allocation2 + $0x3]]
    %s81 = scalar_lea.vmem [#allocation8], 6
    %v82 = vld [vmem:[%s81] sm:$0x3]
    %v83 = vld [vmem:[%s81 + $0x8] sm:$0x3]
    %v84 = vstv %s80
    %v85 = vmul.f32 %v84, %v82
    %v86 = vmul.f32 %v84, %v83
    %v87 = vadd.f32 %v78, %v85
    %v88 = vadd.f32 %v79, %v86
    %s89 = sld [smem:[#allocation6]]
    %v90 = vstv %s89
    %v91 = vadd.f32 %v87, %v90
    %v92 = vadd.f32 %v88, %v90
    %93 = vst [vmem:[#allocation9] sm:$0x3] %v91
    %94 = vst [vmem:[#allocation9 + $0x6] sm:$0x3] %v92
    %s95 = sld [smem:[#allocation2 + $0x80]]
    %v96 = vld [vmem:[#allocation8] sm:$0x3]
    %v97 = vld [vmem:[#allocation8 + $0x8] sm:$0x3]
    %v98 = vstv %s95
    %v99 = vmul.f32 %v98, %v96
    %v100 = vmul.f32 %v98, %v97
    %s101 = sld [smem:[#allocation2 + $0x81]]
    %v102 = vld [vmem:[%s63] sm:$0x3]
    %v103 = vld [vmem:[%s63 + $0x8] sm:$0x3]
    %v104 = vstv %s101
    %v105 = vmul.f32 %v104, %v102
    %v106 = vmul.f32 %v104, %v103
    %v107 = vadd.f32 %v99, %v105
    %v108 = vadd.f32 %v100, %v106
    %s109 = sld [smem:[#allocation2 + $0x82]]
    %v110 = vld [vmem:[%s72] sm:$0x3]
    %v111 = vld [vmem:[%s72 + $0x8] sm:$0x3]
    %v112 = vstv %s109
    %v113 = vmul.f32 %v112, %v110
    %v114 = vmul.f32 %v112, %v111
    %v115 = vadd.f32 %v107, %v113
    %v116 = vadd.f32 %v108, %v114
    %s117 = sld [smem:[#allocation2 + $0x83]]
    %v118 = vld [vmem:[%s81] sm:$0x3]
    %v119 = vld [vmem:[%s81 + $0x8] sm:$0x3]
    %v120 = vstv %s117
    %v121 = vmul.f32 %v120, %v118
    %v122 = vmul.f32 %v120, %v119
    %v123 = vadd.f32 %v115, %v121
    %v124 = vadd.f32 %v116, %v122
    %s125 = sld [smem:[#allocation6 + $0x1]]
    %v126 = vstv %s125
    %v127 = vadd.f32 %v123, %v126
    %v128 = vadd.f32 %v124, %v126
    %s129 = scalar_lea.vmem [#allocation9], 2
    %130 = vst [vmem:[%s129] sm:$0x3] %v127
    %131 = vst [vmem:[%s129 + $0x6] sm:$0x3] %v128
    %s132 = sld [smem:[#allocation2 + $0x100]]
    %v133 = vld [vmem:[#allocation8] sm:$0x3]
    %v134 = vld [vmem:[#allocation8 + $0x8] sm:$0x3]
    %v135 = vstv %s132
    %v136 = vmul.f32 %v135, %v133
    %v137 = vmul.f32 %v135, %v134
    %s138 = sld [smem:[#allocation2 + $0x101]]
    %v139 = vld [vmem:[%s63] sm:$0x3]
    %v140 = vld [vmem:[%s63 + $0x8] sm:$0x3]
    %v141 = vstv %s138
    %v142 = vmul.f32 %v141, %v139
    %v143 = vmul.f32 %v141, %v140
    %v144 = vadd.f32 %v136, %v142
    %v145 = vadd.f32 %v137, %v143
    %s146 = sld [smem:[#allocation2 + $0x102]]
    %v147 = vld [vmem:[%s72] sm:$0x3]
    %v148 = vld [vmem:[%s72 + $0x8] sm:$0x3]
    %v149 = vstv %s146
    %v150 = vmul.f32 %v149, %v147
    %v151 = vmul.f32 %v149, %v148
    %v152 = vadd.f32 %v144, %v150
    %v153 = vadd.f32 %v145, %v151
    %s154 = sld [smem:[#allocation2 + $0x103]]
    %v155 = vld [vmem:[%s81] sm:$0x3]
    %v156 = vld [vmem:[%s81 + $0x8] sm:$0x3]
    %v157 = vstv %s154
    %v158 = vmul.f32 %v157, %v155
    %v159 = vmul.f32 %v157, %v156
    %v160 = vadd.f32 %v152, %v158
    %v161 = vadd.f32 %v153, %v159
    %s162 = sld [smem:[#allocation6 + $0x2]]
    %v163 = vstv %s162
    %v164 = vadd.f32 %v160, %v163
    %v165 = vadd.f32 %v161, %v163
    %s166 = scalar_lea.vmem [#allocation9], 4
    %167 = vst [vmem:[%s166] sm:$0x3] %v164
    %168 = vst [vmem:[%s166 + $0x6] sm:$0x3] %v165
    // Predicated region
    $region26: #{tpu_custom_call.1} parent=1 // pred_check
      _
    $region27: #{tpu_custom_call.1} parent=1 // pred_check_branch
      %170 = sbr.rel (0) target = $region29
    $region28: #{tpu_custom_call.1} parent=1 // pred_region
      %172 = vsyncadd [#allocation4], 0
      %s173 = sshll.u32 [#allocation9], 4
      %s174 = int_to_ptr.vmem [resolvable:$true] %s173
      %s175 = sshll.u32 %s3, 4
      %s176 = int_to_ptr.hbm [resolvable:$true] %s175
      %181 = dma.vmem_to_hbm [thread:$0]  %s174, 192, %s176, [#allocation4], 32, 32, 2
    $region29: #{tpu_custom_call.1} parent=1 // pred_fallthru
      _
    // Predicated region
    $region30: #{tpu_custom_call.1} parent=1 // pred_check
      _
    $region31: #{tpu_custom_call.1} parent=1 // pred_check_branch
      %183 = sbr.rel (0) target = $region33
    $region32: #{tpu_custom_call.1} parent=1 // pred_region
      %185 = dma.done [#allocation4], 192
    $region33: #{tpu_custom_call.1} parent=1 // pred_fallthru
      _
    %186 = vsyncpa [#allocation3], 1
    %187 = vsyncpa [#allocation4], 1
    %188 = vsyncpa [#allocation5], 1
    %189 = vsyncpa [#allocation7], 1

</llo_original>
